<compile_context>
chip_gen: v7x
topology: tpu7x:2x2x1
jax: 0.10.0
libtpu: 0.0.40
codegen_flags: <defaults>
</compile_context>

<pallas_src>
import jax
import jax.numpy as jnp
from jax.experimental import pallas as pl
from jax.experimental.pallas import tpu as pltpu


def lstm_fused_kernel(x_ref, len_ref, wih_ref, whh_ref, bias_ref, out_ref):
    """Fused input projection + serial LSTM recurrence.

    x_ref   : (T*Bp, E) f32   time-major flattened input
    len_ref : (Bp, 1)   i32   sequence lengths (0 for padded batch rows)
    wih_ref : (E, 4H)   f32   input weight, pre-transposed
    whh_ref : (H, 4H)   f32   recurrent weight, pre-transposed
    bias_ref: (1, 4H)   f32   b_ih + b_hh
    out_ref : (Bp, H)   f32   h_n
    """
    Bp, H = out_ref.shape
    T = x_ref.shape[0] // Bp

    # One time-parallel MXU matmul for all T steps; bias folded in.
    # gx: (T*Bp, 4H), flat, so each timestep slice is sublane-contiguous.
    gx = (jnp.dot(x_ref[...], wih_ref[...], preferred_element_type=jnp.float32)
          + bias_ref[...])

    whh = whh_ref[...]                                     # (H, 4H), loop-invariant

    # Hoisted mask machinery: broadcast lengths to (Bp, H) ONCE.
    lens_b = jnp.broadcast_to(len_ref[...], (Bp, H))       # (Bp, H) int32

    h = jnp.zeros((Bp, H), jnp.float32)                    # prev_state == None -> zeros
    c = jnp.zeros((Bp, H), jnp.float32)

    # T is small & static -> full static unroll; only one small MXU push
    # (h @ W_hh^T) + 3 EUP pushes remain on the serial critical path per step.
    for t in range(T):
        gates = gx[t * Bp:(t + 1) * Bp, :] + jnp.dot(
            h, whh, preferred_element_type=jnp.float32)     # (Bp, 4H)

        # Full-vreg transcendentals, then 32-lane slices of the results.
        # PyTorch gate ordering: input, forget, cell(g), output.
        sig = jax.nn.sigmoid(gates)                          # (Bp, 4H)
        th = jnp.tanh(gates)                                 # (Bp, 4H)
        i = sig[:, 0 * H:1 * H]
        f = sig[:, 1 * H:2 * H]
        g = th[:, 2 * H:3 * H]
        o = sig[:, 3 * H:4 * H]

        c_new = f * c + i * g
        h_new = o * jnp.tanh(c_new)

        # packed-sequence semantics: sequences with length <= t stop updating.
        mask = t < lens_b                                    # (Bp, H) bool
        h = jnp.where(mask, h_new, h)
        c = jnp.where(mask, c_new, c)

    out_ref[...] = h.astype(out_ref.dtype)


def prepare_lstm_params(w_ih, w_hh, b_ih, b_hh):
    """One-time (parameter-load time) weight transpose + bias fold."""
    w_ih_t = jnp.transpose(w_ih).astype(jnp.float32)         # (E, 4H)
    w_hh_t = jnp.transpose(w_hh).astype(jnp.float32)         # (H, 4H)
    bias = (b_ih + b_hh).astype(jnp.float32).reshape(1, -1)  # (1, 4H)
    return w_ih_t, w_hh_t, bias


def lstm_encoder_forward(x_bte, lengths, w_ih_t, w_hh_t, bias):
    """x_bte: (B, T, E) float32, lengths: (B,) int -> h_n: (B, H) float32."""
    B, T, E = x_bte.shape
    H = w_hh_t.shape[0]
    Bp = ((B + 7) // 8) * 8                                   # pad batch to 8 sublanes

    if Bp != B:
        x_p = jnp.pad(x_bte, ((0, Bp - B), (0, 0), (0, 0)))
        len_p = jnp.pad(lengths.astype(jnp.int32), (0, Bp - B))   # pad rows: length 0
    else:
        x_p, len_p = x_bte, lengths.astype(jnp.int32)

    # Tiny (~4 KB) transpose to time-major, flattened so that the in-kernel
    # gate tensor (T*Bp, 4H) has each timestep sublane-contiguous.
    x_tm = x_p.transpose(1, 0, 2).reshape(T * Bp, E).astype(jnp.float32)
    len2d = len_p.reshape(Bp, 1)

    h_out = pl.pallas_call(
        lstm_fused_kernel,
        out_shape=jax.ShapeDtypeStruct((Bp, H), jnp.float32),
        in_specs=[
            pl.BlockSpec(memory_space=pltpu.MemorySpace.VMEM),   # x (time-major, flat)
            pl.BlockSpec(memory_space=pltpu.MemorySpace.VMEM),   # lengths
            pl.BlockSpec(memory_space=pltpu.MemorySpace.VMEM),   # W_ih^T
            pl.BlockSpec(memory_space=pltpu.MemorySpace.VMEM),   # W_hh^T
            pl.BlockSpec(memory_space=pltpu.MemorySpace.VMEM),   # bias
        ],
        out_specs=pl.BlockSpec(memory_space=pltpu.MemorySpace.VMEM),
    )(x_tm, len2d, w_ih_t, w_hh_t, bias)

    return h_out[:B].astype(x_bte.dtype)


lstm_encoder_forward = jax.jit(lstm_encoder_forward)


def lstm_encoder_reference(x_bte, lengths, w_ih, w_hh, b_ih, b_hh):
    """Pure-JAX reference of packed-LSTM h_n for validation."""
    B, T, E = x_bte.shape
    H = w_hh.shape[1]
    h = jnp.zeros((B, H), jnp.float32)
    c = jnp.zeros((B, H), jnp.float32)
    for t in range(T):
        x_t = x_bte[:, t, :]
        gates = x_t @ w_ih.T + h @ w_hh.T + b_ih + b_hh
        i = jax.nn.sigmoid(gates[:, 0 * H:1 * H])
        f = jax.nn.sigmoid(gates[:, 1 * H:2 * H])
        g = jnp.tanh(gates[:, 2 * H:3 * H])
        o = jax.nn.sigmoid(gates[:, 3 * H:4 * H])
        c_new = f * c + i * g
        h_new = o * jnp.tanh(c_new)
        mask = (t < lengths)[:, None]
        h = jnp.where(mask, h_new, h)
        c = jnp.where(mask, c_new, c)
    return h


if __name__ == "__main__":
    # config: embedding_dim=16, lstm_num_hidden=32; batch=4, max seq len T=8
    B, T, E, H = 4, 8, 16, 32

    key = jax.random.PRNGKey(0)
    k_x, k_wih, k_whh, k_bih, k_bhh = jax.random.split(key, 5)

    stdv = 1.0 / jnp.sqrt(H)  # PyTorch nn.LSTM default init range
    x = jax.random.normal(k_x, (B, T, E), dtype=jnp.float32)
    lengths = jnp.array([8, 5, 3, 6], dtype=jnp.int32)
    w_ih = jax.random.uniform(k_wih, (4 * H, E), minval=-stdv, maxval=stdv, dtype=jnp.float32)
    w_hh = jax.random.uniform(k_whh, (4 * H, H), minval=-stdv, maxval=stdv, dtype=jnp.float32)
    b_ih = jax.random.uniform(k_bih, (4 * H,), minval=-stdv, maxval=stdv, dtype=jnp.float32)
    b_hh = jax.random.uniform(k_bhh, (4 * H,), minval=-stdv, maxval=stdv, dtype=jnp.float32)

    # TODO(synk): config.dpout_lstm is ignored — PyTorch applies LSTM dropout only
    # between layers, so it is a no-op for num_layers=1.

    w_ih_t, w_hh_t, bias = prepare_lstm_params(w_ih, w_hh, b_ih, b_hh)

    h_n = lstm_encoder_forward(x, lengths, w_ih_t, w_hh_t, bias)
    h_n = jax.block_until_ready(h_n)

    h_ref = lstm_encoder_reference(x, lengths, w_ih, w_hh, b_ih, b_hh)
    assert h_n.shape == (B, H)
    assert jnp.allclose(h_n, h_ref, rtol=1e-3, atol=1e-3), "mismatch vs reference"

    print("KERNEL_OK")
</pallas_src>

<mosaic_0001>
module attributes {stable_mosaic.version = 11 : i64} {
  func.func @lstm_fused_kernel(%arg0: memref<64x16xf32, #tpu.memory_space<vmem>>, %arg1: memref<8x1xi32, #tpu.memory_space<vmem>>, %arg2: memref<16x128xf32, #tpu.memory_space<vmem>>, %arg3: memref<32x128xf32, #tpu.memory_space<vmem>>, %arg4: memref<1x128xf32, #tpu.memory_space<vmem>>, %arg5: memref<8x32xf32, #tpu.memory_space<vmem>>) attributes {dimension_semantics = [], scalar_prefetch = 0 : i64, scratch_operands = 0 : i64, tpu.core_type = #tpu.core_type<tc>} {
    %c0 = arith.constant 0 : index
    %c0_0 = arith.constant 0 : index
    %0 = vector.load %arg0[%c0, %c0_0] : memref<64x16xf32, #tpu.memory_space<vmem>>, vector<64x16xf32>
    %c0_1 = arith.constant 0 : index
    %c0_2 = arith.constant 0 : index
    %1 = vector.load %arg2[%c0_1, %c0_2] : memref<16x128xf32, #tpu.memory_space<vmem>>, vector<16x128xf32>
    %cst = arith.constant dense<0.000000e+00> : vector<64x128xf32>
    %2 = tpu.matmul %0, %1, %cst {dimension_numbers = #tpu.dot_dimension_numbers<[1], [0], [0], [1], [0, 0, 1, 1], [], []>} : vector<64x16xf32>, vector<16x128xf32>, vector<64x128xf32> -> vector<64x128xf32>
    %c0_3 = arith.constant 0 : index
    %c0_4 = arith.constant 0 : index
    %3 = vector.load %arg4[%c0_3, %c0_4] : memref<1x128xf32, #tpu.memory_space<vmem>>, vector<1x128xf32>
    %4 = vector.broadcast %3 : vector<1x128xf32> to vector<64x128xf32>
    %5 = arith.addf %2, %4 : vector<64x128xf32>
    %c0_5 = arith.constant 0 : index
    %c0_6 = arith.constant 0 : index
    %6 = vector.load %arg3[%c0_5, %c0_6] : memref<32x128xf32, #tpu.memory_space<vmem>>, vector<32x128xf32>
    %c0_7 = arith.constant 0 : index
    %c0_8 = arith.constant 0 : index
    %7 = vector.load %arg1[%c0_7, %c0_8] : memref<8x1xi32, #tpu.memory_space<vmem>>, vector<8x1xi32>
    %8 = vector.shape_cast %7 : vector<8x1xi32> to vector<8x1xi32>
    %9 = vector.broadcast %8 : vector<8x1xi32> to vector<8x32xi32>
    %cst_9 = arith.constant 0.000000e+00 : f32
    %10 = vector.broadcast %cst_9 : f32 to vector<8x32xf32>
    %cst_10 = arith.constant 0.000000e+00 : f32
    %11 = vector.broadcast %cst_10 : f32 to vector<8x32xf32>
    %12 = vector.extract_strided_slice %5 {offsets = [0, 0], sizes = [8, 128], strides = [1, 1]} : vector<64x128xf32> to vector<8x128xf32>
    %cst_11 = arith.constant dense<0.000000e+00> : vector<8x128xf32>
    %13 = tpu.matmul %10, %6, %cst_11 {dimension_numbers = #tpu.dot_dimension_numbers<[1], [0], [0], [1], [0, 0, 1, 1], [], []>} : vector<8x32xf32>, vector<32x128xf32>, vector<8x128xf32> -> vector<8x128xf32>
    %14 = arith.addf %12, %13 : vector<8x128xf32>
    %15 = arith.negf %14 : vector<8x128xf32>
    %16 = math.exp %15 : vector<8x128xf32>
    %cst_12 = arith.constant 1.000000e+00 : f32
    %17 = vector.broadcast %cst_12 : f32 to vector<8x128xf32>
    %18 = arith.addf %17, %16 : vector<8x128xf32>
    %19 = arith.divf %17, %18 : vector<8x128xf32>
    %20 = math.tanh %14 : vector<8x128xf32>
    %21 = vector.extract_strided_slice %19 {offsets = [0, 0], sizes = [8, 32], strides = [1, 1]} : vector<8x128xf32> to vector<8x32xf32>
    %22 = vector.extract_strided_slice %19 {offsets = [0, 32], sizes = [8, 32], strides = [1, 1]} : vector<8x128xf32> to vector<8x32xf32>
    %23 = vector.extract_strided_slice %20 {offsets = [0, 64], sizes = [8, 32], strides = [1, 1]} : vector<8x128xf32> to vector<8x32xf32>
    %24 = vector.extract_strided_slice %19 {offsets = [0, 96], sizes = [8, 32], strides = [1, 1]} : vector<8x128xf32> to vector<8x32xf32>
    %25 = arith.mulf %22, %11 : vector<8x32xf32>
    %26 = arith.mulf %21, %23 : vector<8x32xf32>
    %27 = arith.addf %25, %26 : vector<8x32xf32>
    %28 = math.tanh %27 : vector<8x32xf32>
    %29 = arith.mulf %24, %28 : vector<8x32xf32>
    %c0_i32 = arith.constant 0 : i32
    %30 = vector.broadcast %c0_i32 : i32 to vector<8x32xi32>
    %31 = arith.cmpi sgt, %9, %30 : vector<8x32xi32>
    %32 = arith.select %31, %29, %10 : vector<8x32xi1>, vector<8x32xf32>
    %33 = arith.select %31, %27, %11 : vector<8x32xi1>, vector<8x32xf32>
    %34 = vector.extract_strided_slice %5 {offsets = [8, 0], sizes = [8, 128], strides = [1, 1]} : vector<64x128xf32> to vector<8x128xf32>
    %cst_13 = arith.constant dense<0.000000e+00> : vector<8x128xf32>
    %35 = tpu.matmul %32, %6, %cst_13 {dimension_numbers = #tpu.dot_dimension_numbers<[1], [0], [0], [1], [0, 0, 1, 1], [], []>} : vector<8x32xf32>, vector<32x128xf32>, vector<8x128xf32> -> vector<8x128xf32>
    %36 = arith.addf %34, %35 : vector<8x128xf32>
    %37 = arith.negf %36 : vector<8x128xf32>
    %38 = math.exp %37 : vector<8x128xf32>
    %cst_14 = arith.constant 1.000000e+00 : f32
    %39 = vector.broadcast %cst_14 : f32 to vector<8x128xf32>
    %40 = arith.addf %39, %38 : vector<8x128xf32>
    %41 = arith.divf %39, %40 : vector<8x128xf32>
    %42 = math.tanh %36 : vector<8x128xf32>
    %43 = vector.extract_strided_slice %41 {offsets = [0, 0], sizes = [8, 32], strides = [1, 1]} : vector<8x128xf32> to vector<8x32xf32>
    %44 = vector.extract_strided_slice %41 {offsets = [0, 32], sizes = [8, 32], strides = [1, 1]} : vector<8x128xf32> to vector<8x32xf32>
    %45 = vector.extract_strided_slice %42 {offsets = [0, 64], sizes = [8, 32], strides = [1, 1]} : vector<8x128xf32> to vector<8x32xf32>
    %46 = vector.extract_strided_slice %41 {offsets = [0, 96], sizes = [8, 32], strides = [1, 1]} : vector<8x128xf32> to vector<8x32xf32>
    %47 = arith.mulf %44, %33 : vector<8x32xf32>
    %48 = arith.mulf %43, %45 : vector<8x32xf32>
    %49 = arith.addf %47, %48 : vector<8x32xf32>
    %50 = math.tanh %49 : vector<8x32xf32>
    %51 = arith.mulf %46, %50 : vector<8x32xf32>
    %c1_i32 = arith.constant 1 : i32
    %52 = vector.broadcast %c1_i32 : i32 to vector<8x32xi32>
    %53 = arith.cmpi sgt, %9, %52 : vector<8x32xi32>
    %54 = arith.select %53, %51, %32 : vector<8x32xi1>, vector<8x32xf32>
    %55 = arith.select %53, %49, %33 : vector<8x32xi1>, vector<8x32xf32>
    %56 = vector.extract_strided_slice %5 {offsets = [16, 0], sizes = [8, 128], strides = [1, 1]} : vector<64x128xf32> to vector<8x128xf32>
    %cst_15 = arith.constant dense<0.000000e+00> : vector<8x128xf32>
    %57 = tpu.matmul %54, %6, %cst_15 {dimension_numbers = #tpu.dot_dimension_numbers<[1], [0], [0], [1], [0, 0, 1, 1], [], []>} : vector<8x32xf32>, vector<32x128xf32>, vector<8x128xf32> -> vector<8x128xf32>
    %58 = arith.addf %56, %57 : vector<8x128xf32>
    %59 = arith.negf %58 : vector<8x128xf32>
    %60 = math.exp %59 : vector<8x128xf32>
    %cst_16 = arith.constant 1.000000e+00 : f32
    %61 = vector.broadcast %cst_16 : f32 to vector<8x128xf32>
    %62 = arith.addf %61, %60 : vector<8x128xf32>
    %63 = arith.divf %61, %62 : vector<8x128xf32>
    %64 = math.tanh %58 : vector<8x128xf32>
    %65 = vector.extract_strided_slice %63 {offsets = [0, 0], sizes = [8, 32], strides = [1, 1]} : vector<8x128xf32> to vector<8x32xf32>
    %66 = vector.extract_strided_slice %63 {offsets = [0, 32], sizes = [8, 32], strides = [1, 1]} : vector<8x128xf32> to vector<8x32xf32>
    %67 = vector.extract_strided_slice %64 {offsets = [0, 64], sizes = [8, 32], strides = [1, 1]} : vector<8x128xf32> to vector<8x32xf32>
    %68 = vector.extract_strided_slice %63 {offsets = [0, 96], sizes = [8, 32], strides = [1, 1]} : vector<8x128xf32> to vector<8x32xf32>
    %69 = arith.mulf %66, %55 : vector<8x32xf32>
    %70 = arith.mulf %65, %67 : vector<8x32xf32>
    %71 = arith.addf %69, %70 : vector<8x32xf32>
    %72 = math.tanh %71 : vector<8x32xf32>
    %73 = arith.mulf %68, %72 : vector<8x32xf32>
    %c2_i32 = arith.constant 2 : i32
    %74 = vector.broadcast %c2_i32 : i32 to vector<8x32xi32>
    %75 = arith.cmpi sgt, %9, %74 : vector<8x32xi32>
    %76 = arith.select %75, %73, %54 : vector<8x32xi1>, vector<8x32xf32>
    %77 = arith.select %75, %71, %55 : vector<8x32xi1>, vector<8x32xf32>
    %78 = vector.extract_strided_slice %5 {offsets = [24, 0], sizes = [8, 128], strides = [1, 1]} : vector<64x128xf32> to vector<8x128xf32>
    %cst_17 = arith.constant dense<0.000000e+00> : vector<8x128xf32>
    %79 = tpu.matmul %76, %6, %cst_17 {dimension_numbers = #tpu.dot_dimension_numbers<[1], [0], [0], [1], [0, 0, 1, 1], [], []>} : vector<8x32xf32>, vector<32x128xf32>, vector<8x128xf32> -> vector<8x128xf32>
    %80 = arith.addf %78, %79 : vector<8x128xf32>
    %81 = arith.negf %80 : vector<8x128xf32>
    %82 = math.exp %81 : vector<8x128xf32>
    %cst_18 = arith.constant 1.000000e+00 : f32
    %83 = vector.broadcast %cst_18 : f32 to vector<8x128xf32>
    %84 = arith.addf %83, %82 : vector<8x128xf32>
    %85 = arith.divf %83, %84 : vector<8x128xf32>
    %86 = math.tanh %80 : vector<8x128xf32>
    %87 = vector.extract_strided_slice %85 {offsets = [0, 0], sizes = [8, 32], strides = [1, 1]} : vector<8x128xf32> to vector<8x32xf32>
    %88 = vector.extract_strided_slice %85 {offsets = [0, 32], sizes = [8, 32], strides = [1, 1]} : vector<8x128xf32> to vector<8x32xf32>
    %89 = vector.extract_strided_slice %86 {offsets = [0, 64], sizes = [8, 32], strides = [1, 1]} : vector<8x128xf32> to vector<8x32xf32>
    %90 = vector.extract_strided_slice %85 {offsets = [0, 96], sizes = [8, 32], strides = [1, 1]} : vector<8x128xf32> to vector<8x32xf32>
    %91 = arith.mulf %88, %77 : vector<8x32xf32>
    %92 = arith.mulf %87, %89 : vector<8x32xf32>
    %93 = arith.addf %91, %92 : vector<8x32xf32>
    %94 = math.tanh %93 : vector<8x32xf32>
    %95 = arith.mulf %90, %94 : vector<8x32xf32>
    %c3_i32 = arith.constant 3 : i32
    %96 = vector.broadcast %c3_i32 : i32 to vector<8x32xi32>
    %97 = arith.cmpi sgt, %9, %96 : vector<8x32xi32>
    %98 = arith.select %97, %95, %76 : vector<8x32xi1>, vector<8x32xf32>
    %99 = arith.select %97, %93, %77 : vector<8x32xi1>, vector<8x32xf32>
    %100 = vector.extract_strided_slice %5 {offsets = [32, 0], sizes = [8, 128], strides = [1, 1]} : vector<64x128xf32> to vector<8x128xf32>
    %cst_19 = arith.constant dense<0.000000e+00> : vector<8x128xf32>
    %101 = tpu.matmul %98, %6, %cst_19 {dimension_numbers = #tpu.dot_dimension_numbers<[1], [0], [0], [1], [0, 0, 1, 1], [], []>} : vector<8x32xf32>, vector<32x128xf32>, vector<8x128xf32> -> vector<8x128xf32>
    %102 = arith.addf %100, %101 : vector<8x128xf32>
    %103 = arith.negf %102 : vector<8x128xf32>
    %104 = math.exp %103 : vector<8x128xf32>
    %cst_20 = arith.constant 1.000000e+00 : f32
    %105 = vector.broadcast %cst_20 : f32 to vector<8x128xf32>
    %106 = arith.addf %105, %104 : vector<8x128xf32>
    %107 = arith.divf %105, %106 : vector<8x128xf32>
    %108 = math.tanh %102 : vector<8x128xf32>
    %109 = vector.extract_strided_slice %107 {offsets = [0, 0], sizes = [8, 32], strides = [1, 1]} : vector<8x128xf32> to vector<8x32xf32>
    %110 = vector.extract_strided_slice %107 {offsets = [0, 32], sizes = [8, 32], strides = [1, 1]} : vector<8x128xf32> to vector<8x32xf32>
    %111 = vector.extract_strided_slice %108 {offsets = [0, 64], sizes = [8, 32], strides = [1, 1]} : vector<8x128xf32> to vector<8x32xf32>
    %112 = vector.extract_strided_slice %107 {offsets = [0, 96], sizes = [8, 32], strides = [1, 1]} : vector<8x128xf32> to vector<8x32xf32>
    %113 = arith.mulf %110, %99 : vector<8x32xf32>
    %114 = arith.mulf %109, %111 : vector<8x32xf32>
    %115 = arith.addf %113, %114 : vector<8x32xf32>
    %116 = math.tanh %115 : vector<8x32xf32>
    %117 = arith.mulf %112, %116 : vector<8x32xf32>
    %c4_i32 = arith.constant 4 : i32
    %118 = vector.broadcast %c4_i32 : i32 to vector<8x32xi32>
    %119 = arith.cmpi sgt, %9, %118 : vector<8x32xi32>
    %120 = arith.select %119, %117, %98 : vector<8x32xi1>, vector<8x32xf32>
    %121 = arith.select %119, %115, %99 : vector<8x32xi1>, vector<8x32xf32>
    %122 = vector.extract_strided_slice %5 {offsets = [40, 0], sizes = [8, 128], strides = [1, 1]} : vector<64x128xf32> to vector<8x128xf32>
    %cst_21 = arith.constant dense<0.000000e+00> : vector<8x128xf32>
    %123 = tpu.matmul %120, %6, %cst_21 {dimension_numbers = #tpu.dot_dimension_numbers<[1], [0], [0], [1], [0, 0, 1, 1], [], []>} : vector<8x32xf32>, vector<32x128xf32>, vector<8x128xf32> -> vector<8x128xf32>
    %124 = arith.addf %122, %123 : vector<8x128xf32>
    %125 = arith.negf %124 : vector<8x128xf32>
    %126 = math.exp %125 : vector<8x128xf32>
    %cst_22 = arith.constant 1.000000e+00 : f32
    %127 = vector.broadcast %cst_22 : f32 to vector<8x128xf32>
    %128 = arith.addf %127, %126 : vector<8x128xf32>
    %129 = arith.divf %127, %128 : vector<8x128xf32>
    %130 = math.tanh %124 : vector<8x128xf32>
    %131 = vector.extract_strided_slice %129 {offsets = [0, 0], sizes = [8, 32], strides = [1, 1]} : vector<8x128xf32> to vector<8x32xf32>
    %132 = vector.extract_strided_slice %129 {offsets = [0, 32], sizes = [8, 32], strides = [1, 1]} : vector<8x128xf32> to vector<8x32xf32>
    %133 = vector.extract_strided_slice %130 {offsets = [0, 64], sizes = [8, 32], strides = [1, 1]} : vector<8x128xf32> to vector<8x32xf32>
    %134 = vector.extract_strided_slice %129 {offsets = [0, 96], sizes = [8, 32], strides = [1, 1]} : vector<8x128xf32> to vector<8x32xf32>
    %135 = arith.mulf %132, %121 : vector<8x32xf32>
    %136 = arith.mulf %131, %133 : vector<8x32xf32>
    %137 = arith.addf %135, %136 : vector<8x32xf32>
    %138 = math.tanh %137 : vector<8x32xf32>
    %139 = arith.mulf %134, %138 : vector<8x32xf32>
    %c5_i32 = arith.constant 5 : i32
    %140 = vector.broadcast %c5_i32 : i32 to vector<8x32xi32>
    %141 = arith.cmpi sgt, %9, %140 : vector<8x32xi32>
    %142 = arith.select %141, %139, %120 : vector<8x32xi1>, vector<8x32xf32>
    %143 = arith.select %141, %137, %121 : vector<8x32xi1>, vector<8x32xf32>
    %144 = vector.extract_strided_slice %5 {offsets = [48, 0], sizes = [8, 128], strides = [1, 1]} : vector<64x128xf32> to vector<8x128xf32>
    %cst_23 = arith.constant dense<0.000000e+00> : vector<8x128xf32>
    %145 = tpu.matmul %142, %6, %cst_23 {dimension_numbers = #tpu.dot_dimension_numbers<[1], [0], [0], [1], [0, 0, 1, 1], [], []>} : vector<8x32xf32>, vector<32x128xf32>, vector<8x128xf32> -> vector<8x128xf32>
    %146 = arith.addf %144, %145 : vector<8x128xf32>
    %147 = arith.negf %146 : vector<8x128xf32>
    %148 = math.exp %147 : vector<8x128xf32>
    %cst_24 = arith.constant 1.000000e+00 : f32
    %149 = vector.broadcast %cst_24 : f32 to vector<8x128xf32>
    %150 = arith.addf %149, %148 : vector<8x128xf32>
    %151 = arith.divf %149, %150 : vector<8x128xf32>
    %152 = math.tanh %146 : vector<8x128xf32>
    %153 = vector.extract_strided_slice %151 {offsets = [0, 0], sizes = [8, 32], strides = [1, 1]} : vector<8x128xf32> to vector<8x32xf32>
    %154 = vector.extract_strided_slice %151 {offsets = [0, 32], sizes = [8, 32], strides = [1, 1]} : vector<8x128xf32> to vector<8x32xf32>
    %155 = vector.extract_strided_slice %152 {offsets = [0, 64], sizes = [8, 32], strides = [1, 1]} : vector<8x128xf32> to vector<8x32xf32>
    %156 = vector.extract_strided_slice %151 {offsets = [0, 96], sizes = [8, 32], strides = [1, 1]} : vector<8x128xf32> to vector<8x32xf32>
    %157 = arith.mulf %154, %143 : vector<8x32xf32>
    %158 = arith.mulf %153, %155 : vector<8x32xf32>
    %159 = arith.addf %157, %158 : vector<8x32xf32>
    %160 = math.tanh %159 : vector<8x32xf32>
    %161 = arith.mulf %156, %160 : vector<8x32xf32>
    %c6_i32 = arith.constant 6 : i32
    %162 = vector.broadcast %c6_i32 : i32 to vector<8x32xi32>
    %163 = arith.cmpi sgt, %9, %162 : vector<8x32xi32>
    %164 = arith.select %163, %161, %142 : vector<8x32xi1>, vector<8x32xf32>
    %165 = arith.select %163, %159, %143 : vector<8x32xi1>, vector<8x32xf32>
    %166 = vector.extract_strided_slice %5 {offsets = [56, 0], sizes = [8, 128], strides = [1, 1]} : vector<64x128xf32> to vector<8x128xf32>
    %cst_25 = arith.constant dense<0.000000e+00> : vector<8x128xf32>
    %167 = tpu.matmul %164, %6, %cst_25 {dimension_numbers = #tpu.dot_dimension_numbers<[1], [0], [0], [1], [0, 0, 1, 1], [], []>} : vector<8x32xf32>, vector<32x128xf32>, vector<8x128xf32> -> vector<8x128xf32>
    %168 = arith.addf %166, %167 : vector<8x128xf32>
    %169 = arith.negf %168 : vector<8x128xf32>
    %170 = math.exp %169 : vector<8x128xf32>
    %cst_26 = arith.constant 1.000000e+00 : f32
    %171 = vector.broadcast %cst_26 : f32 to vector<8x128xf32>
    %172 = arith.addf %171, %170 : vector<8x128xf32>
    %173 = arith.divf %171, %172 : vector<8x128xf32>
    %174 = math.tanh %168 : vector<8x128xf32>
    %175 = vector.extract_strided_slice %173 {offsets = [0, 0], sizes = [8, 32], strides = [1, 1]} : vector<8x128xf32> to vector<8x32xf32>
    %176 = vector.extract_strided_slice %173 {offsets = [0, 32], sizes = [8, 32], strides = [1, 1]} : vector<8x128xf32> to vector<8x32xf32>
    %177 = vector.extract_strided_slice %174 {offsets = [0, 64], sizes = [8, 32], strides = [1, 1]} : vector<8x128xf32> to vector<8x32xf32>
    %178 = vector.extract_strided_slice %173 {offsets = [0, 96], sizes = [8, 32], strides = [1, 1]} : vector<8x128xf32> to vector<8x32xf32>
    %179 = arith.mulf %176, %165 : vector<8x32xf32>
    %180 = arith.mulf %175, %177 : vector<8x32xf32>
    %181 = arith.addf %179, %180 : vector<8x32xf32>
    %182 = math.tanh %181 : vector<8x32xf32>
    %183 = arith.mulf %178, %182 : vector<8x32xf32>
    %c7_i32 = arith.constant 7 : i32
    %184 = vector.broadcast %c7_i32 : i32 to vector<8x32xi32>
    %185 = arith.cmpi sgt, %9, %184 : vector<8x32xi32>
    %186 = arith.select %185, %183, %164 : vector<8x32xi1>, vector<8x32xf32>
    %c0_27 = arith.constant 0 : index
    %c0_28 = arith.constant 0 : index
    %187 = vector.load %arg5[%c0_27, %c0_28] : memref<8x32xf32, #tpu.memory_space<vmem>>, vector<8x32xf32>
    tpu.vector_store %arg5[%c0_27, %c0_28], %186 {strides = array<i32>} : memref<8x32xf32, #tpu.memory_space<vmem>>, vector<8x32xf32>,
    return
  }
}

</mosaic_0001>

<llo_original>
// kernel: lstm_encoder_forward.1
$region0: #{lstm_encoder_forward.1}
  #allocation0 [shape = 'u32[]', space=smem, size = 0x4, offset = 0x4, fixed_abs, tag = 'smem constant byte address 0x4 - core index']
  #allocation1 [shape = 'u32[144,128]{1,0:T(1,128)}', space=vmem, size = 0x12000, scoped, tag = 'internal scratch']
  %s0 = inlined_call_operand.vmem [shape: f32[64,16], index: 0, kind: input, shape index: {}]
  %s1 = inlined_call_operand.vmem [shape: s32[8,1], index: 1, kind: input, shape index: {}]
  %s2 = inlined_call_operand.vmem [shape: f32[16,128], index: 2, kind: input, shape index: {}]
  %s3 = inlined_call_operand.vmem [shape: f32[32,128], index: 3, kind: input, shape index: {}]
  %s4 = inlined_call_operand.vmem [shape: f32[1,128], index: 4, kind: input, shape index: {}]
  %s5 = inlined_call_operand.vmem [shape: f32[8,32], index: 5, kind: output, shape index: {}]
  %s6 = sld [smem:[#allocation0]]
  $region30: #{lstm_encoder_forward.1} parent=0
    _
  %s8 = ssub.s32 1, %s6
  %s9 = scalar_select 0, %s8, %s6
  // Predicated region
  $region2: #{lstm_encoder_forward.1} parent=0 // pred_check
    _
  $region3: #{lstm_encoder_forward.1} parent=0 // pred_check_branch
    %11 = sbr.rel (0) target = $region5
  $region4: #{lstm_encoder_forward.1} parent=0 // pred_region
    _
  $region5: #{lstm_encoder_forward.1} parent=0 // pred_fallthru
    _
  // Predicated region
  $region6: #{lstm_encoder_forward.1} parent=0 // pred_check
    _
  $region7: #{lstm_encoder_forward.1} parent=0 // pred_check_branch
    %13 = sbr.rel (0) target = $region9
  $region8: #{lstm_encoder_forward.1} parent=0 // pred_region
    _
  $region9: #{lstm_encoder_forward.1} parent=0 // pred_fallthru
    _
  // Predicated region
  $region10: #{lstm_encoder_forward.1} parent=0 // pred_check
    _
  $region11: #{lstm_encoder_forward.1} parent=0 // pred_check_branch
    %15 = sbr.rel (0) target = $region13
  $region12: #{lstm_encoder_forward.1} parent=0 // pred_region
    _
  $region13: #{lstm_encoder_forward.1} parent=0 // pred_fallthru
    _
  // Predicated region
  $region14: #{lstm_encoder_forward.1} parent=0 // pred_check
    _
  $region15: #{lstm_encoder_forward.1} parent=0 // pred_check_branch
    %17 = sbr.rel (0) target = $region17
  $region16: #{lstm_encoder_forward.1} parent=0 // pred_region
    _
  $region17: #{lstm_encoder_forward.1} parent=0 // pred_fallthru
    _
  // Predicated region
  $region18: #{lstm_encoder_forward.1} parent=0 // pred_check
    _
  $region19: #{lstm_encoder_forward.1} parent=0 // pred_check_branch
    %19 = sbr.rel (0) target = $region21
  $region20: #{lstm_encoder_forward.1} parent=0 // pred_region
    _
  $region21: #{lstm_encoder_forward.1} parent=0 // pred_fallthru
    _
  %v20 = vld [vmem:[%s0] sm:$0xff]
  %v21 = vld [vmem:[%s0 + $0x8] sm:$0xff]
  %v22 = vld [vmem:[%s0 + $0x10] sm:$0xff]
  %v23 = vld [vmem:[%s0 + $0x18] sm:$0xff]
  %v24 = vld [vmem:[%s0 + $0x20] sm:$0xff]
  %v25 = vld [vmem:[%s0 + $0x28] sm:$0xff]
  %v26 = vld [vmem:[%s0 + $0x30] sm:$0xff]
  %v27 = vld [vmem:[%s0 + $0x38] sm:$0xff]
  %v28 = vld [vmem:[%s2] sm:$0xff]
  %v29 = vld [vmem:[%s2 + $0x8] sm:$0xff]
  %v30 = vld [vmem:[%s4] sm:$0x1]
  %v32 = vlaneseq
  %v33 = vshrl.u32 %v32, 7
  %v34 = vsub.s32 0, %v33
  %v35 = vrot.slane %v30, %v34
  %vm37 = vcmask 130048
  %v39 = vsel %vm37, %v20, 0
  %v42 = vsel %vm37, %v21, 0
  %v45 = vsel %vm37, %v22, 0
  %v48 = vsel %vm37, %v23, 0
  %v51 = vsel %vm37, %v24, 0
  %v54 = vsel %vm37, %v25, 0
  %v57 = vsel %vm37, %v26, 0
  %v60 = vsel %vm37, %v27, 0
  %62 = vmatprep.subr.mxu0 0.0
  %63 = vmatpush1.msra.mxu0 %v28
  %64 = vmatprep.subr.mxu0 0.0
  %65 = vmatpush1.msra.mxu0 %v29
  %66 = vmatprep.subr.mxu0 0.0
  %67 = vmatpush1.msra.mxu0 0.0
  %68 = vmatprep.subr.mxu0 0.0
  %69 = vmatpush1.msra.mxu0 0.0
  %70 = vmatprep.subr.mxu0 0.0
  %71 = vmatpush1.msra.mxu0 0.0
  %72 = vmatprep.subr.mxu0 0.0
  %73 = vmatpush1.msra.mxu0 0.0
  %74 = vmatprep.subr.mxu0 0.0
  %75 = vmatpush1.msra.mxu0 0.0
  %76 = vmatprep.subr.mxu0 0.0
  %77 = vmatpush1.msra.mxu0 0.0
  %78 = vmatprep.subr.mxu0 0.0
  %79 = vmatpush1.msra.mxu0 0.0
  %80 = vmatprep.subr.mxu0 0.0
  %81 = vmatpush1.msra.mxu0 0.0
  %82 = vmatprep.subr.mxu0 0.0
  %83 = vmatpush1.msra.mxu0 0.0
  %84 = vmatprep.subr.mxu0 0.0
  %85 = vmatpush1.msra.mxu0 0.0
  %86 = vmatprep.subr.mxu0 0.0
  %87 = vmatpush1.msra.mxu0 0.0
  %88 = vmatprep.subr.mxu0 0.0
  %89 = vmatpush1.msra.mxu0 0.0
  %90 = vmatprep.subr.mxu0 0.0
  %91 = vmatpush1.msra.mxu0 0.0
  %92 = vmatprep.subr.mxu0 0.0
  %93 = vmatpush1.msra.mxu0 0.0
  %94 = vmatprep.subr.mxu0 0.0
  %95 = vmatpush1.msra.mxu0 0.0
  %96 = vmatprep.subr.mxu0 0.0
  %97 = vmatpush1.msra.mxu0 0.0
  %98 = vmatprep.subr.mxu0 0.0
  %99 = vmatpush1.msra.mxu0 0.0
  %100 = vmatprep.subr.mxu0 0.0
  %101 = vmatpush1.msra.mxu0 0.0
  %102 = vmatprep.subr.mxu0 0.0
  %103 = vmatpush1.msra.mxu0 0.0
  %104 = vmatprep.subr.mxu0 0.0
  %105 = vmatpush1.msra.mxu0 0.0
  %106 = vmatprep.subr.mxu0 0.0
  %107 = vmatpush1.msra.mxu0 0.0
  %108 = vmatprep.subr.mxu0 0.0
  %109 = vmatpush1.msra.mxu0 0.0
  %110 = vmatprep.subr.mxu0 0.0
  %111 = vmatpush1.msra.mxu0 0.0
  %112 = vmatprep.subr.mxu0 0.0
  %113 = vmatpush1.msra.mxu0 0.0
  %114 = vmatprep.subr.mxu0 0.0
  %115 = vmatpush1.msra.mxu0 0.0
  %116 = vmatprep.subr.mxu0 0.0
  %117 = vmatpush1.msra.mxu0 0.0
  %118 = vmatprep.subr.mxu0 0.0
  %119 = vmatpush1.msra.mxu0 0.0
  %120 = vmatprep.subr.mxu0 0.0
  %121 = vmatpush1.msra.mxu0 0.0
  %122 = vmatprep.subr.mxu0 0.0
  %123 = vmatpush1.msra.mxu0 0.0
  %124 = vmatprep.subr.mxu0 0.0
  %125 = vmatpush1.msra.mxu0 0.0
  %126 = vmatprep.mubr.f32.mxu0 0.0
  %127 = vmatmul.mubr.f32.gmra.mrb[0].mxu0 %v39
  %v128 = vpop.f32.mrb[0].mxu0
  %v129 = vadd.f32 %v35, %v128
  %v130 = vpop.f32.mrb[0].mxu0
  %131 = vmatprep.mubr.f32.mxu0 0.0
  %132 = vmatmul.mubr.f32.gmra.mrb[0].mxu0 %v42
  %v133 = vpop.f32.mrb[0].mxu0
  %v134 = vadd.f32 %v35, %v133
  %v135 = vpop.f32.mrb[0].mxu0
  %136 = vmatprep.mubr.f32.mxu0 0.0
  %137 = vmatmul.mubr.f32.gmra.mrb[0].mxu0 %v45
  %v138 = vpop.f32.mrb[0].mxu0
  %v139 = vadd.f32 %v35, %v138
  %v140 = vpop.f32.mrb[0].mxu0
  %141 = vmatprep.mubr.f32.mxu0 0.0
  %142 = vmatmul.mubr.f32.gmra.mrb[0].mxu0 %v48
  %v143 = vpop.f32.mrb[0].mxu0
  %v144 = vadd.f32 %v35, %v143
  %v145 = vpop.f32.mrb[0].mxu0
  %146 = vmatprep.mubr.f32.mxu0 0.0
  %147 = vmatmul.mubr.f32.gmra.mrb[0].mxu0 %v51
  %v148 = vpop.f32.mrb[0].mxu0
  %v149 = vadd.f32 %v35, %v148
  %v150 = vpop.f32.mrb[0].mxu0
  %151 = vmatprep.mubr.f32.mxu0 0.0
  %152 = vmatmul.mubr.f32.gmra.mrb[0].mxu0 %v54
  %v153 = vpop.f32.mrb[0].mxu0
  %v154 = vadd.f32 %v35, %v153
  %v155 = vpop.f32.mrb[0].mxu0
  %156 = vmatprep.mubr.f32.mxu0 0.0
  %157 = vmatmul.mubr.f32.gmra.mrb[0].mxu0 %v57
  %v158 = vpop.f32.mrb[0].mxu0
  %v159 = vadd.f32 %v35, %v158
  %v160 = vpop.f32.mrb[0].mxu0
  %161 = vmatprep.mubr.f32.mxu0 0.0
  %162 = vmatmul.mubr.f32.gmra.mrb[0].mxu0 %v60
  %v163 = vpop.f32.mrb[0].mxu0
  %v164 = vadd.f32 %v35, %v163
  %v165 = vpop.f32.mrb[0].mxu0
  %166 = vdwg.mxu0
  %v167 = vld [vmem:[%s3] sm:$0xff]
  %v168 = vld [vmem:[%s3 + $0x8] sm:$0xff]
  %v169 = vld [vmem:[%s3 + $0x10] sm:$0xff]
  %v170 = vld [vmem:[%s3 + $0x18] sm:$0xff]
  %v171 = vld [vmem:[%s1] sm:$0xff]
  %172 = vset.pattern.permute.xlu0 0
  %173 = vperm.xlu0 %172, %v171
  %v174 = vpop.permute.xlu0 %173
  %vm175 = vcmask 261120
  %v177 = vsel %vm175, 0.0, 0
  %179 = vmatprep.subr.mxu0 0.0
  %180 = vmatpush1.msra.mxu0 %v167
  %181 = vmatprep.subr.mxu0 0.0
  %182 = vmatpush1.msra.mxu0 %v168
  %183 = vmatprep.subr.mxu0 0.0
  %184 = vmatpush1.msra.mxu0 %v169
  %185 = vmatprep.subr.mxu0 0.0
  %186 = vmatpush1.msra.mxu0 %v170
  %187 = vmatprep.subr.mxu0 0.0
  %188 = vmatpush1.msra.mxu0 0.0
  %189 = vmatprep.subr.mxu0 0.0
  %190 = vmatpush1.msra.mxu0 0.0
  %191 = vmatprep.subr.mxu0 0.0
  %192 = vmatpush1.msra.mxu0 0.0
  %193 = vmatprep.subr.mxu0 0.0
  %194 = vmatpush1.msra.mxu0 0.0
  %195 = vmatprep.subr.mxu0 0.0
  %196 = vmatpush1.msra.mxu0 0.0
  %197 = vmatprep.subr.mxu0 0.0
  %198 = vmatpush1.msra.mxu0 0.0
  %199 = vmatprep.subr.mxu0 0.0
  %200 = vmatpush1.msra.mxu0 0.0
  %201 = vmatprep.subr.mxu0 0.0
  %202 = vmatpush1.msra.mxu0 0.0
  %203 = vmatprep.subr.mxu0 0.0
  %204 = vmatpush1.msra.mxu0 0.0
  %205 = vmatprep.subr.mxu0 0.0
  %206 = vmatpush1.msra.mxu0 0.0
  %207 = vmatprep.subr.mxu0 0.0
  %208 = vmatpush1.msra.mxu0 0.0
  %209 = vmatprep.subr.mxu0 0.0
  %210 = vmatpush1.msra.mxu0 0.0
  %211 = vmatprep.subr.mxu0 0.0
  %212 = vmatpush1.msra.mxu0 0.0
  %213 = vmatprep.subr.mxu0 0.0
  %214 = vmatpush1.msra.mxu0 0.0
  %215 = vmatprep.subr.mxu0 0.0
  %216 = vmatpush1.msra.mxu0 0.0
  %217 = vmatprep.subr.mxu0 0.0
  %218 = vmatpush1.msra.mxu0 0.0
  %219 = vmatprep.subr.mxu0 0.0
  %220 = vmatpush1.msra.mxu0 0.0
  %221 = vmatprep.subr.mxu0 0.0
  %222 = vmatpush1.msra.mxu0 0.0
  %223 = vmatprep.subr.mxu0 0.0
  %224 = vmatpush1.msra.mxu0 0.0
  %225 = vmatprep.subr.mxu0 0.0
  %226 = vmatpush1.msra.mxu0 0.0
  %227 = vmatprep.subr.mxu0 0.0
  %228 = vmatpush1.msra.mxu0 0.0
  %229 = vmatprep.subr.mxu0 0.0
  %230 = vmatpush1.msra.mxu0 0.0
  %231 = vmatprep.subr.mxu0 0.0
  %232 = vmatpush1.msra.mxu0 0.0
  %233 = vmatprep.subr.mxu0 0.0
  %234 = vmatpush1.msra.mxu0 0.0
  %235 = vmatprep.subr.mxu0 0.0
  %236 = vmatpush1.msra.mxu0 0.0
  %237 = vmatprep.subr.mxu0 0.0
  %238 = vmatpush1.msra.mxu0 0.0
  %239 = vmatprep.subr.mxu0 0.0
  %240 = vmatpush1.msra.mxu0 0.0
  %241 = vmatprep.subr.mxu0 0.0
  %242 = vmatpush1.msra.mxu0 0.0
  %243 = vmatprep.mubr.f32.mxu0 0.0
  %244 = vmatmul.mubr.f32.gmra.mrb[0].mxu0 %v177
  %v245 = vpop.f32.mrb[0].mxu0
  %v246 = vadd.f32 0.0, %v245
  %v247 = vpop.f32.mrb[0].mxu0
  %248 = vdwg.mxu0
  %v249 = vadd.f32 %v129, %v246
  %v250 = vxor.u32 %v249, 2147483648
  %v251 = vmul.f32 %v250, 1.442695
  %v252 = vpow.pop %v251
  %v253 = vadd.f32 %v252, 1.0
  %v254 = vrcp.pop %v253
  %v255 = vmul.f32 1.0, %v254
  %v256 = vtanh.pop %v249
  %v257 = vmul.f32 %v255, 0.0
  %259 = vrot.lane.b32.xlu0 %v256, 64
  %v260 = vpop.permute.xlu0 %259
  %v262 = vmul.f32 %v255, %v260
  %264 = vrot.lane.b32.xlu0 %v262, 32
  %v265 = vpop.permute.xlu0 %264
  %v267 = vadd.f32 %v257, %v265
  %v268 = vtanh.pop %v267
  %270 = vrot.lane.b32.xlu0 %v268, 64
  %v271 = vpop.permute.xlu0 %270
  %v273 = vmul.f32 %v255, %v271
  %vm274 = vcmp.gt.s32.totalorder %v174, 0
  %v275 = vsel %vm274, %v273, 0.0
  %v276 = vsel %vm274, %v267, 0.0
  %278 = vrot.lane.b32.xlu0 %v275, 32
  %v279 = vpop.permute.xlu0 %278
  %v280 = vsel %vm175, %v279, 0
  %282 = vmatprep.subr.mxu0 0.0
  %283 = vmatpush1.msra.mxu0 %v167
  %284 = vmatprep.subr.mxu0 0.0
  %285 = vmatpush1.msra.mxu0 %v168
  %286 = vmatprep.subr.mxu0 0.0
  %287 = vmatpush1.msra.mxu0 %v169
  %288 = vmatprep.subr.mxu0 0.0
  %289 = vmatpush1.msra.mxu0 %v170
  %290 = vmatprep.subr.mxu0 0.0
  %291 = vmatpush1.msra.mxu0 0.0
  %292 = vmatprep.subr.mxu0 0.0
  %293 = vmatpush1.msra.mxu0 0.0
  %294 = vmatprep.subr.mxu0 0.0
  %295 = vmatpush1.msra.mxu0 0.0
  %296 = vmatprep.subr.mxu0 0.0
  %297 = vmatpush1.msra.mxu0 0.0
  %298 = vmatprep.subr.mxu0 0.0
  %299 = vmatpush1.msra.mxu0 0.0
  %300 = vmatprep.subr.mxu0 0.0
  %301 = vmatpush1.msra.mxu0 0.0
  %302 = vmatprep.subr.mxu0 0.0
  %303 = vmatpush1.msra.mxu0 0.0
  %304 = vmatprep.subr.mxu0 0.0
  %305 = vmatpush1.msra.mxu0 0.0
  %306 = vmatprep.subr.mxu0 0.0
  %307 = vmatpush1.msra.mxu0 0.0
  %308 = vmatprep.subr.mxu0 0.0
  %309 = vmatpush1.msra.mxu0 0.0
  %310 = vmatprep.subr.mxu0 0.0
  %311 = vmatpush1.msra.mxu0 0.0
  %312 = vmatprep.subr.mxu0 0.0
  %313 = vmatpush1.msra.mxu0 0.0
  %314 = vmatprep.subr.mxu0 0.0
  %315 = vmatpush1.msra.mxu0 0.0
  %316 = vmatprep.subr.mxu0 0.0
  %317 = vmatpush1.msra.mxu0 0.0
  %318 = vmatprep.subr.mxu0 0.0
  %319 = vmatpush1.msra.mxu0 0.0
  %320 = vmatprep.subr.mxu0 0.0
  %321 = vmatpush1.msra.mxu0 0.0
  %322 = vmatprep.subr.mxu0 0.0
  %323 = vmatpush1.msra.mxu0 0.0
  %324 = vmatprep.subr.mxu0 0.0
  %325 = vmatpush1.msra.mxu0 0.0
  %326 = vmatprep.subr.mxu0 0.0
  %327 = vmatpush1.msra.mxu0 0.0
  %328 = vmatprep.subr.mxu0 0.0
  %329 = vmatpush1.msra.mxu0 0.0
  %330 = vmatprep.subr.mxu0 0.0
  %331 = vmatpush1.msra.mxu0 0.0
  %332 = vmatprep.subr.mxu0 0.0
  %333 = vmatpush1.msra.mxu0 0.0
  %334 = vmatprep.subr.mxu0 0.0
  %335 = vmatpush1.msra.mxu0 0.0
  %336 = vmatprep.subr.mxu0 0.0
  %337 = vmatpush1.msra.mxu0 0.0
  %338 = vmatprep.subr.mxu0 0.0
  %339 = vmatpush1.msra.mxu0 0.0
  %340 = vmatprep.subr.mxu0 0.0
  %341 = vmatpush1.msra.mxu0 0.0
  %342 = vmatprep.subr.mxu0 0.0
  %343 = vmatpush1.msra.mxu0 0.0
  %344 = vmatprep.subr.mxu0 0.0
  %345 = vmatpush1.msra.mxu0 0.0
  %346 = vmatprep.mubr.f32.mxu0 0.0
  %347 = vmatmul.mubr.f32.gmra.mrb[0].mxu0 %v280
  %v348 = vpop.f32.mrb[0].mxu0
  %v349 = vadd.f32 0.0, %v348
  %v350 = vpop.f32.mrb[0].mxu0
  %351 = vdwg.mxu0
  %v352 = vadd.f32 %v134, %v349
  %v353 = vxor.u32 %v352, 2147483648
  %v354 = vmul.f32 %v353, 1.442695
  %v355 = vpow.pop %v354
  %v356 = vadd.f32 %v355, 1.0
  %v357 = vrcp.pop %v356
  %v358 = vmul.f32 1.0, %v357
  %v359 = vtanh.pop %v352
  %v360 = vmul.f32 %v358, %v276
  %362 = vrot.lane.b32.xlu0 %v359, 64
  %v363 = vpop.permute.xlu0 %362
  %v365 = vmul.f32 %v358, %v363
  %367 = vrot.lane.b32.xlu0 %v365, 32
  %v368 = vpop.permute.xlu0 %367
  %v370 = vadd.f32 %v360, %v368
  %v371 = vtanh.pop %v370
  %373 = vrot.lane.b32.xlu0 %v371, 64
  %v374 = vpop.permute.xlu0 %373
  %v376 = vmul.f32 %v358, %v374
  %vm377 = vcmp.gt.s32.totalorder %v174, 1
  %v378 = vsel %vm377, %v376, %v275
  %v379 = vsel %vm377, %v370, %v276
  %381 = vrot.lane.b32.xlu0 %v378, 32
  %v382 = vpop.permute.xlu0 %381
  %v383 = vsel %vm175, %v382, 0
  %385 = vmatprep.subr.mxu0 0.0
  %386 = vmatpush1.msra.mxu0 %v167
  %387 = vmatprep.subr.mxu0 0.0
  %388 = vmatpush1.msra.mxu0 %v168
  %389 = vmatprep.subr.mxu0 0.0
  %390 = vmatpush1.msra.mxu0 %v169
  %391 = vmatprep.subr.mxu0 0.0
  %392 = vmatpush1.msra.mxu0 %v170
  %393 = vmatprep.subr.mxu0 0.0
  %394 = vmatpush1.msra.mxu0 0.0
  %395 = vmatprep.subr.mxu0 0.0
  %396 = vmatpush1.msra.mxu0 0.0
  %397 = vmatprep.subr.mxu0 0.0
  %398 = vmatpush1.msra.mxu0 0.0
  %399 = vmatprep.subr.mxu0 0.0
  %400 = vmatpush1.msra.mxu0 0.0
  %401 = vmatprep.subr.mxu0 0.0
  %402 = vmatpush1.msra.mxu0 0.0
  %403 = vmatprep.subr.mxu0 0.0
  %404 = vmatpush1.msra.mxu0 0.0
  %405 = vmatprep.subr.mxu0 0.0
  %406 = vmatpush1.msra.mxu0 0.0
  %407 = vmatprep.subr.mxu0 0.0
  %408 = vmatpush1.msra.mxu0 0.0
  %409 = vmatprep.subr.mxu0 0.0
  %410 = vmatpush1.msra.mxu0 0.0
  %411 = vmatprep.subr.mxu0 0.0
  %412 = vmatpush1.msra.mxu0 0.0
  %413 = vmatprep.subr.mxu0 0.0
  %414 = vmatpush1.msra.mxu0 0.0
  %415 = vmatprep.subr.mxu0 0.0
  %416 = vmatpush1.msra.mxu0 0.0
  %417 = vmatprep.subr.mxu0 0.0
  %418 = vmatpush1.msra.mxu0 0.0
  %419 = vmatprep.subr.mxu0 0.0
  %420 = vmatpush1.msra.mxu0 0.0
  %421 = vmatprep.subr.mxu0 0.0
  %422 = vmatpush1.msra.mxu0 0.0
  %423 = vmatprep.subr.mxu0 0.0
  %424 = vmatpush1.msra.mxu0 0.0
  %425 = vmatprep.subr.mxu0 0.0
  %426 = vmatpush1.msra.mxu0 0.0
  %427 = vmatprep.subr.mxu0 0.0
  %428 = vmatpush1.msra.mxu0 0.0
  %429 = vmatprep.subr.mxu0 0.0
  %430 = vmatpush1.msra.mxu0 0.0
  %431 = vmatprep.subr.mxu0 0.0
  %432 = vmatpush1.msra.mxu0 0.0
  %433 = vmatprep.subr.mxu0 0.0
  %434 = vmatpush1.msra.mxu0 0.0
  %435 = vmatprep.subr.mxu0 0.0
  %436 = vmatpush1.msra.mxu0 0.0
  %437 = vmatprep.subr.mxu0 0.0
  %438 = vmatpush1.msra.mxu0 0.0
  %439 = vmatprep.subr.mxu0 0.0
  %440 = vmatpush1.msra.mxu0 0.0
  %441 = vmatprep.subr.mxu0 0.0
  %442 = vmatpush1.msra.mxu0 0.0
  %443 = vmatprep.subr.mxu0 0.0
  %444 = vmatpush1.msra.mxu0 0.0
  %445 = vmatprep.subr.mxu0 0.0
  %446 = vmatpush1.msra.mxu0 0.0
  %447 = vmatprep.subr.mxu0 0.0
  %448 = vmatpush1.msra.mxu0 0.0
  %449 = vmatprep.mubr.f32.mxu0 0.0
  %450 = vmatmul.mubr.f32.gmra.mrb[0].mxu0 %v383
  %v451 = vpop.f32.mrb[0].mxu0
  %v452 = vadd.f32 0.0, %v451
  %v453 = vpop.f32.mrb[0].mxu0
  %454 = vdwg.mxu0
  %v455 = vadd.f32 %v139, %v452
  %v456 = vxor.u32 %v455, 2147483648
  %v457 = vmul.f32 %v456, 1.442695
  %v458 = vpow.pop %v457
  %v459 = vadd.f32 %v458, 1.0
  %v460 = vrcp.pop %v459
  %v461 = vmul.f32 1.0, %v460
  %v462 = vtanh.pop %v455
  %v463 = vmul.f32 %v461, %v379
  %465 = vrot.lane.b32.xlu0 %v462, 64
  %v466 = vpop.permute.xlu0 %465
  %v468 = vmul.f32 %v461, %v466
  %470 = vrot.lane.b32.xlu0 %v468, 32
  %v471 = vpop.permute.xlu0 %470
  %v473 = vadd.f32 %v463, %v471
  %v474 = vtanh.pop %v473
  %476 = vrot.lane.b32.xlu0 %v474, 64
  %v477 = vpop.permute.xlu0 %476
  %v479 = vmul.f32 %v461, %v477
  %vm480 = vcmp.gt.s32.totalorder %v174, 2
  %v481 = vsel %vm480, %v479, %v378
  %v482 = vsel %vm480, %v473, %v379
  %484 = vrot.lane.b32.xlu0 %v481, 32
  %v485 = vpop.permute.xlu0 %484
  %v486 = vsel %vm175, %v485, 0
  %488 = vmatprep.subr.mxu0 0.0
  %489 = vmatpush1.msra.mxu0 %v167
  %490 = vmatprep.subr.mxu0 0.0
  %491 = vmatpush1.msra.mxu0 %v168
  %492 = vmatprep.subr.mxu0 0.0
  %493 = vmatpush1.msra.mxu0 %v169
  %494 = vmatprep.subr.mxu0 0.0
  %495 = vmatpush1.msra.mxu0 %v170
  %496 = vmatprep.subr.mxu0 0.0
  %497 = vmatpush1.msra.mxu0 0.0
  %498 = vmatprep.subr.mxu0 0.0
  %499 = vmatpush1.msra.mxu0 0.0
  %500 = vmatprep.subr.mxu0 0.0
  %501 = vmatpush1.msra.mxu0 0.0
  %502 = vmatprep.subr.mxu0 0.0
  %503 = vmatpush1.msra.mxu0 0.0
  %504 = vmatprep.subr.mxu0 0.0
  %505 = vmatpush1.msra.mxu0 0.0
  %506 = vmatprep.subr.mxu0 0.0
  %507 = vmatpush1.msra.mxu0 0.0
  %508 = vmatprep.subr.mxu0 0.0
  %509 = vmatpush1.msra.mxu0 0.0
  %510 = vmatprep.subr.mxu0 0.0
  %511 = vmatpush1.msra.mxu0 0.0
  %512 = vmatprep.subr.mxu0 0.0
  %513 = vmatpush1.msra.mxu0 0.0
  %514 = vmatprep.subr.mxu0 0.0
  %515 = vmatpush1.msra.mxu0 0.0
  %516 = vmatprep.subr.mxu0 0.0
  %517 = vmatpush1.msra.mxu0 0.0
  %518 = vmatprep.subr.mxu0 0.0
  %519 = vmatpush1.msra.mxu0 0.0
  %520 = vmatprep.subr.mxu0 0.0
  %521 = vmatpush1.msra.mxu0 0.0
  %522 = vmatprep.subr.mxu0 0.0
  %523 = vmatpush1.msra.mxu0 0.0
  %524 = vmatprep.subr.mxu0 0.0
  %525 = vmatpush1.msra.mxu0 0.0
  %526 = vmatprep.subr.mxu0 0.0
  %527 = vmatpush1.msra.mxu0 0.0
  %528 = vmatprep.subr.mxu0 0.0
  %529 = vmatpush1.msra.mxu0 0.0
  %530 = vmatprep.subr.mxu0 0.0
  %531 = vmatpush1.msra.mxu0 0.0
  %532 = vmatprep.subr.mxu0 0.0
  %533 = vmatpush1.msra.mxu0 0.0
  %534 = vmatprep.subr.mxu0 0.0
  %535 = vmatpush1.msra.mxu0 0.0
  %536 = vmatprep.subr.mxu0 0.0
  %537 = vmatpush1.msra.mxu0 0.0
  %538 = vmatprep.subr.mxu0 0.0
  %539 = vmatpush1.msra.mxu0 0.0
  %540 = vmatprep.subr.mxu0 0.0
  %541 = vmatpush1.msra.mxu0 0.0
  %542 = vmatprep.subr.mxu0 0.0
  %543 = vmatpush1.msra.mxu0 0.0
  %544 = vmatprep.subr.mxu0 0.0
  %545 = vmatpush1.msra.mxu0 0.0
  %546 = vmatprep.subr.mxu0 0.0
  %547 = vmatpush1.msra.mxu0 0.0
  %548 = vmatprep.subr.mxu0 0.0
  %549 = vmatpush1.msra.mxu0 0.0
  %550 = vmatprep.subr.mxu0 0.0
  %551 = vmatpush1.msra.mxu0 0.0
  %552 = vmatprep.mubr.f32.mxu0 0.0
  %553 = vmatmul.mubr.f32.gmra.mrb[0].mxu0 %v486
  %v554 = vpop.f32.mrb[0].mxu0
  %v555 = vadd.f32 0.0, %v554
  %v556 = vpop.f32.mrb[0].mxu0
  %557 = vdwg.mxu0
  %v558 = vadd.f32 %v144, %v555
  %v559 = vxor.u32 %v558, 2147483648
  %v560 = vmul.f32 %v559, 1.442695
  %v561 = vpow.pop %v560
  %v562 = vadd.f32 %v561, 1.0
  %v563 = vrcp.pop %v562
  %v564 = vmul.f32 1.0, %v563
  %v565 = vtanh.pop %v558
  %v566 = vmul.f32 %v564, %v482
  %568 = vrot.lane.b32.xlu0 %v565, 64
  %v569 = vpop.permute.xlu0 %568
  %v571 = vmul.f32 %v564, %v569
  %573 = vrot.lane.b32.xlu0 %v571, 32
  %v574 = vpop.permute.xlu0 %573
  %v576 = vadd.f32 %v566, %v574
  %v577 = vtanh.pop %v576
  %579 = vrot.lane.b32.xlu0 %v577, 64
  %v580 = vpop.permute.xlu0 %579
  %v582 = vmul.f32 %v564, %v580
  %vm583 = vcmp.gt.s32.totalorder %v174, 3
  %v584 = vsel %vm583, %v582, %v481
  %v585 = vsel %vm583, %v576, %v482
  %587 = vrot.lane.b32.xlu0 %v584, 32
  %v588 = vpop.permute.xlu0 %587
  %v589 = vsel %vm175, %v588, 0
  %591 = vmatprep.subr.mxu0 0.0
  %592 = vmatpush1.msra.mxu0 %v167
  %593 = vmatprep.subr.mxu0 0.0
  %594 = vmatpush1.msra.mxu0 %v168
  %595 = vmatprep.subr.mxu0 0.0
  %596 = vmatpush1.msra.mxu0 %v169
  %597 = vmatprep.subr.mxu0 0.0
  %598 = vmatpush1.msra.mxu0 %v170
  %599 = vmatprep.subr.mxu0 0.0
  %600 = vmatpush1.msra.mxu0 0.0
  %601 = vmatprep.subr.mxu0 0.0
  %602 = vmatpush1.msra.mxu0 0.0
  %603 = vmatprep.subr.mxu0 0.0
  %604 = vmatpush1.msra.mxu0 0.0
  %605 = vmatprep.subr.mxu0 0.0
  %606 = vmatpush1.msra.mxu0 0.0
  %607 = vmatprep.subr.mxu0 0.0
  %608 = vmatpush1.msra.mxu0 0.0
  %609 = vmatprep.subr.mxu0 0.0
  %610 = vmatpush1.msra.mxu0 0.0
  %611 = vmatprep.subr.mxu0 0.0
  %612 = vmatpush1.msra.mxu0 0.0
  %613 = vmatprep.subr.mxu0 0.0
  %614 = vmatpush1.msra.mxu0 0.0
  %615 = vmatprep.subr.mxu0 0.0
  %616 = vmatpush1.msra.mxu0 0.0
  %617 = vmatprep.subr.mxu0 0.0
  %618 = vmatpush1.msra.mxu0 0.0
  %619 = vmatprep.subr.mxu0 0.0
  %620 = vmatpush1.msra.mxu0 0.0
  %621 = vmatprep.subr.mxu0 0.0
  %622 = vmatpush1.msra.mxu0 0.0
  %623 = vmatprep.subr.mxu0 0.0
  %624 = vmatpush1.msra.mxu0 0.0
  %625 = vmatprep.subr.mxu0 0.0
  %626 = vmatpush1.msra.mxu0 0.0
  %627 = vmatprep.subr.mxu0 0.0
  %628 = vmatpush1.msra.mxu0 0.0
  %629 = vmatprep.subr.mxu0 0.0
  %630 = vmatpush1.msra.mxu0 0.0
  %631 = vmatprep.subr.mxu0 0.0
  %632 = vmatpush1.msra.mxu0 0.0
  %633 = vmatprep.subr.mxu0 0.0
  %634 = vmatpush1.msra.mxu0 0.0
  %635 = vmatprep.subr.mxu0 0.0
  %636 = vmatpush1.msra.mxu0 0.0
  %637 = vmatprep.subr.mxu0 0.0
  %638 = vmatpush1.msra.mxu0 0.0
  %639 = vmatprep.subr.mxu0 0.0
  %640 = vmatpush1.msra.mxu0 0.0
  %641 = vmatprep.subr.mxu0 0.0
  %642 = vmatpush1.msra.mxu0 0.0
  %643 = vmatprep.subr.mxu0 0.0
  %644 = vmatpush1.msra.mxu0 0.0
  %645 = vmatprep.subr.mxu0 0.0
  %646 = vmatpush1.msra.mxu0 0.0
  %647 = vmatprep.subr.mxu0 0.0
  %648 = vmatpush1.msra.mxu0 0.0
  %649 = vmatprep.subr.mxu0 0.0
  %650 = vmatpush1.msra.mxu0 0.0
  %651 = vmatprep.subr.mxu0 0.0
  %652 = vmatpush1.msra.mxu0 0.0
  %653 = vmatprep.subr.mxu0 0.0
  %654 = vmatpush1.msra.mxu0 0.0
  %655 = vmatprep.mubr.f32.mxu0 0.0
  %656 = vmatmul.mubr.f32.gmra.mrb[0].mxu0 %v589
  %v657 = vpop.f32.mrb[0].mxu0
  %v658 = vadd.f32 0.0, %v657
  %v659 = vpop.f32.mrb[0].mxu0
  %660 = vdwg.mxu0
  %v661 = vadd.f32 %v149, %v658
  %v662 = vxor.u32 %v661, 2147483648
  %v663 = vmul.f32 %v662, 1.442695
  %v664 = vpow.pop %v663
  %v665 = vadd.f32 %v664, 1.0
  %v666 = vrcp.pop %v665
  %v667 = vmul.f32 1.0, %v666
  %v668 = vtanh.pop %v661
  %v669 = vmul.f32 %v667, %v585
  %671 = vrot.lane.b32.xlu0 %v668, 64
  %v672 = vpop.permute.xlu0 %671
  %v674 = vmul.f32 %v667, %v672
  %676 = vrot.lane.b32.xlu0 %v674, 32
  %v677 = vpop.permute.xlu0 %676
  %v679 = vadd.f32 %v669, %v677
  %v680 = vtanh.pop %v679
  %682 = vrot.lane.b32.xlu0 %v680, 64
  %v683 = vpop.permute.xlu0 %682
  %v685 = vmul.f32 %v667, %v683
  %vm686 = vcmp.gt.s32.totalorder %v174, 4
  %v687 = vsel %vm686, %v685, %v584
  %v688 = vsel %vm686, %v679, %v585
  %690 = vrot.lane.b32.xlu0 %v687, 32
  %v691 = vpop.permute.xlu0 %690
  %v692 = vsel %vm175, %v691, 0
  %694 = vmatprep.subr.mxu0 0.0
  %695 = vmatpush1.msra.mxu0 %v167
  %696 = vmatprep.subr.mxu0 0.0
  %697 = vmatpush1.msra.mxu0 %v168
  %698 = vmatprep.subr.mxu0 0.0
  %699 = vmatpush1.msra.mxu0 %v169
  %700 = vmatprep.subr.mxu0 0.0
  %701 = vmatpush1.msra.mxu0 %v170
  %702 = vmatprep.subr.mxu0 0.0
  %703 = vmatpush1.msra.mxu0 0.0
  %704 = vmatprep.subr.mxu0 0.0
  %705 = vmatpush1.msra.mxu0 0.0
  %706 = vmatprep.subr.mxu0 0.0
  %707 = vmatpush1.msra.mxu0 0.0
  %708 = vmatprep.subr.mxu0 0.0
  %709 = vmatpush1.msra.mxu0 0.0
  %710 = vmatprep.subr.mxu0 0.0
  %711 = vmatpush1.msra.mxu0 0.0
  %712 = vmatprep.subr.mxu0 0.0
  %713 = vmatpush1.msra.mxu0 0.0
  %714 = vmatprep.subr.mxu0 0.0
  %715 = vmatpush1.msra.mxu0 0.0
  %716 = vmatprep.subr.mxu0 0.0
  %717 = vmatpush1.msra.mxu0 0.0
  %718 = vmatprep.subr.mxu0 0.0
  %719 = vmatpush1.msra.mxu0 0.0
  %720 = vmatprep.subr.mxu0 0.0
  %721 = vmatpush1.msra.mxu0 0.0
  %722 = vmatprep.subr.mxu0 0.0
  %723 = vmatpush1.msra.mxu0 0.0
  %724 = vmatprep.subr.mxu0 0.0
  %725 = vmatpush1.msra.mxu0 0.0
  %726 = vmatprep.subr.mxu0 0.0
  %727 = vmatpush1.msra.mxu0 0.0
  %728 = vmatprep.subr.mxu0 0.0
  %729 = vmatpush1.msra.mxu0 0.0
  %730 = vmatprep.subr.mxu0 0.0
  %731 = vmatpush1.msra.mxu0 0.0
  %732 = vmatprep.subr.mxu0 0.0
  %733 = vmatpush1.msra.mxu0 0.0
  %734 = vmatprep.subr.mxu0 0.0
  %735 = vmatpush1.msra.mxu0 0.0
  %736 = vmatprep.subr.mxu0 0.0
  %737 = vmatpush1.msra.mxu0 0.0
  %738 = vmatprep.subr.mxu0 0.0
  %739 = vmatpush1.msra.mxu0 0.0
  %740 = vmatprep.subr.mxu0 0.0
  %741 = vmatpush1.msra.mxu0 0.0
  %742 = vmatprep.subr.mxu0 0.0
  %743 = vmatpush1.msra.mxu0 0.0
  %744 = vmatprep.subr.mxu0 0.0
  %745 = vmatpush1.msra.mxu0 0.0
  %746 = vmatprep.subr.mxu0 0.0
  %747 = vmatpush1.msra.mxu0 0.0
  %748 = vmatprep.subr.mxu0 0.0
  %749 = vmatpush1.msra.mxu0 0.0
  %750 = vmatprep.subr.mxu0 0.0
  %751 = vmatpush1.msra.mxu0 0.0
  %752 = vmatprep.subr.mxu0 0.0
  %753 = vmatpush1.msra.mxu0 0.0
  %754 = vmatprep.subr.mxu0 0.0
  %755 = vmatpush1.msra.mxu0 0.0
  %756 = vmatprep.subr.mxu0 0.0
  %757 = vmatpush1.msra.mxu0 0.0
  %758 = vmatprep.mubr.f32.mxu0 0.0
  %759 = vmatmul.mubr.f32.gmra.mrb[0].mxu0 %v692
  %v760 = vpop.f32.mrb[0].mxu0
  %v761 = vadd.f32 0.0, %v760
  %v762 = vpop.f32.mrb[0].mxu0
  %763 = vdwg.mxu0
  %v764 = vadd.f32 %v154, %v761
  %v765 = vxor.u32 %v764, 2147483648
  %v766 = vmul.f32 %v765, 1.442695
  %v767 = vpow.pop %v766
  %v768 = vadd.f32 %v767, 1.0
  %v769 = vrcp.pop %v768
  %v770 = vmul.f32 1.0, %v769
  %v771 = vtanh.pop %v764
  %v772 = vmul.f32 %v770, %v688
  %774 = vrot.lane.b32.xlu0 %v771, 64
  %v775 = vpop.permute.xlu0 %774
  %v777 = vmul.f32 %v770, %v775
  %779 = vrot.lane.b32.xlu0 %v777, 32
  %v780 = vpop.permute.xlu0 %779
  %v782 = vadd.f32 %v772, %v780
  %v783 = vtanh.pop %v782
  %785 = vrot.lane.b32.xlu0 %v783, 64
  %v786 = vpop.permute.xlu0 %785
  %v788 = vmul.f32 %v770, %v786
  %vm789 = vcmp.gt.s32.totalorder %v174, 5
  %v790 = vsel %vm789, %v788, %v687
  %v791 = vsel %vm789, %v782, %v688
  %793 = vrot.lane.b32.xlu0 %v790, 32
  %v794 = vpop.permute.xlu0 %793
  %v795 = vsel %vm175, %v794, 0
  %797 = vmatprep.subr.mxu0 0.0
  %798 = vmatpush1.msra.mxu0 %v167
  %799 = vmatprep.subr.mxu0 0.0
  %800 = vmatpush1.msra.mxu0 %v168
  %801 = vmatprep.subr.mxu0 0.0
  %802 = vmatpush1.msra.mxu0 %v169
  %803 = vmatprep.subr.mxu0 0.0
  %804 = vmatpush1.msra.mxu0 %v170
  %805 = vmatprep.subr.mxu0 0.0
  %806 = vmatpush1.msra.mxu0 0.0
  %807 = vmatprep.subr.mxu0 0.0
  %808 = vmatpush1.msra.mxu0 0.0
  %809 = vmatprep.subr.mxu0 0.0
  %810 = vmatpush1.msra.mxu0 0.0
  %811 = vmatprep.subr.mxu0 0.0
  %812 = vmatpush1.msra.mxu0 0.0
  %813 = vmatprep.subr.mxu0 0.0
  %814 = vmatpush1.msra.mxu0 0.0
  %815 = vmatprep.subr.mxu0 0.0
  %816 = vmatpush1.msra.mxu0 0.0
  %817 = vmatprep.subr.mxu0 0.0
  %818 = vmatpush1.msra.mxu0 0.0
  %819 = vmatprep.subr.mxu0 0.0
  %820 = vmatpush1.msra.mxu0 0.0
  %821 = vmatprep.subr.mxu0 0.0
  %822 = vmatpush1.msra.mxu0 0.0
  %823 = vmatprep.subr.mxu0 0.0
  %824 = vmatpush1.msra.mxu0 0.0
  %825 = vmatprep.subr.mxu0 0.0
  %826 = vmatpush1.msra.mxu0 0.0
  %827 = vmatprep.subr.mxu0 0.0
  %828 = vmatpush1.msra.mxu0 0.0
  %829 = vmatprep.subr.mxu0 0.0
  %830 = vmatpush1.msra.mxu0 0.0
  %831 = vmatprep.subr.mxu0 0.0
  %832 = vmatpush1.msra.mxu0 0.0
  %833 = vmatprep.subr.mxu0 0.0
  %834 = vmatpush1.msra.mxu0 0.0
  %835 = vmatprep.subr.mxu0 0.0
  %836 = vmatpush1.msra.mxu0 0.0
  %837 = vmatprep.subr.mxu0 0.0
  %838 = vmatpush1.msra.mxu0 0.0
  %839 = vmatprep.subr.mxu0 0.0
  %840 = vmatpush1.msra.mxu0 0.0
  %841 = vmatprep.subr.mxu0 0.0
  %842 = vmatpush1.msra.mxu0 0.0
  %843 = vmatprep.subr.mxu0 0.0
  %844 = vmatpush1.msra.mxu0 0.0
  %845 = vmatprep.subr.mxu0 0.0
  %846 = vmatpush1.msra.mxu0 0.0
  %847 = vmatprep.subr.mxu0 0.0
  %848 = vmatpush1.msra.mxu0 0.0
  %849 = vmatprep.subr.mxu0 0.0
  %850 = vmatpush1.msra.mxu0 0.0
  %851 = vmatprep.subr.mxu0 0.0
  %852 = vmatpush1.msra.mxu0 0.0
  %853 = vmatprep.subr.mxu0 0.0
  %854 = vmatpush1.msra.mxu0 0.0
  %855 = vmatprep.subr.mxu0 0.0
  %856 = vmatpush1.msra.mxu0 0.0
  %857 = vmatprep.subr.mxu0 0.0
  %858 = vmatpush1.msra.mxu0 0.0
  %859 = vmatprep.subr.mxu0 0.0
  %860 = vmatpush1.msra.mxu0 0.0
  %861 = vmatprep.mubr.f32.mxu0 0.0
  %862 = vmatmul.mubr.f32.gmra.mrb[0].mxu0 %v795
  %v863 = vpop.f32.mrb[0].mxu0
  %v864 = vadd.f32 0.0, %v863
  %v865 = vpop.f32.mrb[0].mxu0
  %866 = vdwg.mxu0
  %v867 = vadd.f32 %v159, %v864
  %v868 = vxor.u32 %v867, 2147483648
  %v869 = vmul.f32 %v868, 1.442695
  %v870 = vpow.pop %v869
  %v871 = vadd.f32 %v870, 1.0
  %v872 = vrcp.pop %v871
  %v873 = vmul.f32 1.0, %v872
  %v874 = vtanh.pop %v867
  %v875 = vmul.f32 %v873, %v791
  %877 = vrot.lane.b32.xlu0 %v874, 64
  %v878 = vpop.permute.xlu0 %877
  %v880 = vmul.f32 %v873, %v878
  %882 = vrot.lane.b32.xlu0 %v880, 32
  %v883 = vpop.permute.xlu0 %882
  %v885 = vadd.f32 %v875, %v883
  %v886 = vtanh.pop %v885
  %888 = vrot.lane.b32.xlu0 %v886, 64
  %v889 = vpop.permute.xlu0 %888
  %v891 = vmul.f32 %v873, %v889
  %vm892 = vcmp.gt.s32.totalorder %v174, 6
  %v893 = vsel %vm892, %v891, %v790
  %v894 = vsel %vm892, %v885, %v791
  %896 = vrot.lane.b32.xlu0 %v893, 32
  %v897 = vpop.permute.xlu0 %896
  %v898 = vsel %vm175, %v897, 0
  %900 = vmatprep.subr.mxu0 0.0
  %901 = vmatpush1.msra.mxu0 %v167
  %902 = vmatprep.subr.mxu0 0.0
  %903 = vmatpush1.msra.mxu0 %v168
  %904 = vmatprep.subr.mxu0 0.0
  %905 = vmatpush1.msra.mxu0 %v169
  %906 = vmatprep.subr.mxu0 0.0
  %907 = vmatpush1.msra.mxu0 %v170
  %908 = vmatprep.subr.mxu0 0.0
  %909 = vmatpush1.msra.mxu0 0.0
  %910 = vmatprep.subr.mxu0 0.0
  %911 = vmatpush1.msra.mxu0 0.0
  %912 = vmatprep.subr.mxu0 0.0
  %913 = vmatpush1.msra.mxu0 0.0
  %914 = vmatprep.subr.mxu0 0.0
  %915 = vmatpush1.msra.mxu0 0.0
  %916 = vmatprep.subr.mxu0 0.0
  %917 = vmatpush1.msra.mxu0 0.0
  %918 = vmatprep.subr.mxu0 0.0
  %919 = vmatpush1.msra.mxu0 0.0
  %920 = vmatprep.subr.mxu0 0.0
  %921 = vmatpush1.msra.mxu0 0.0
  %922 = vmatprep.subr.mxu0 0.0
  %923 = vmatpush1.msra.mxu0 0.0
  %924 = vmatprep.subr.mxu0 0.0
  %925 = vmatpush1.msra.mxu0 0.0
  %926 = vmatprep.subr.mxu0 0.0
  %927 = vmatpush1.msra.mxu0 0.0
  %928 = vmatprep.subr.mxu0 0.0
  %929 = vmatpush1.msra.mxu0 0.0
  %930 = vmatprep.subr.mxu0 0.0
  %931 = vmatpush1.msra.mxu0 0.0
  %932 = vmatprep.subr.mxu0 0.0
  %933 = vmatpush1.msra.mxu0 0.0
  %934 = vmatprep.subr.mxu0 0.0
  %935 = vmatpush1.msra.mxu0 0.0
  %936 = vmatprep.subr.mxu0 0.0
  %937 = vmatpush1.msra.mxu0 0.0
  %938 = vmatprep.subr.mxu0 0.0
  %939 = vmatpush1.msra.mxu0 0.0
  %940 = vmatprep.subr.mxu0 0.0
  %941 = vmatpush1.msra.mxu0 0.0
  %942 = vmatprep.subr.mxu0 0.0
  %943 = vmatpush1.msra.mxu0 0.0
  %944 = vmatprep.subr.mxu0 0.0
  %945 = vmatpush1.msra.mxu0 0.0
  %946 = vmatprep.subr.mxu0 0.0
  %947 = vmatpush1.msra.mxu0 0.0
  %948 = vmatprep.subr.mxu0 0.0
  %949 = vmatpush1.msra.mxu0 0.0
  %950 = vmatprep.subr.mxu0 0.0
  %951 = vmatpush1.msra.mxu0 0.0
  %952 = vmatprep.subr.mxu0 0.0
  %953 = vmatpush1.msra.mxu0 0.0
  %954 = vmatprep.subr.mxu0 0.0
  %955 = vmatpush1.msra.mxu0 0.0
  %956 = vmatprep.subr.mxu0 0.0
  %957 = vmatpush1.msra.mxu0 0.0
  %958 = vmatprep.subr.mxu0 0.0
  %959 = vmatpush1.msra.mxu0 0.0
  %960 = vmatprep.subr.mxu0 0.0
  %961 = vmatpush1.msra.mxu0 0.0
  %962 = vmatprep.subr.mxu0 0.0
  %963 = vmatpush1.msra.mxu0 0.0
  %964 = vmatprep.mubr.f32.mxu0 0.0
  %965 = vmatmul.mubr.f32.gmra.mrb[0].mxu0 %v898
  %v966 = vpop.f32.mrb[0].mxu0
  %v967 = vadd.f32 0.0, %v966
  %v968 = vpop.f32.mrb[0].mxu0
  %969 = vdwg.mxu0
  %v970 = vadd.f32 %v164, %v967
  %v971 = vxor.u32 %v970, 2147483648
  %v972 = vmul.f32 %v971, 1.442695
  %v973 = vpow.pop %v972
  %v974 = vadd.f32 %v973, 1.0
  %v975 = vrcp.pop %v974
  %v976 = vmul.f32 1.0, %v975
  %v977 = vtanh.pop %v970
  %v978 = vmul.f32 %v976, %v894
  %980 = vrot.lane.b32.xlu0 %v977, 64
  %v981 = vpop.permute.xlu0 %980
  %v983 = vmul.f32 %v976, %v981
  %985 = vrot.lane.b32.xlu0 %v983, 32
  %v986 = vpop.permute.xlu0 %985
  %v988 = vadd.f32 %v978, %v986
  %v989 = vtanh.pop %v988
  %991 = vrot.lane.b32.xlu0 %v989, 64
  %v992 = vpop.permute.xlu0 %991
  %v994 = vmul.f32 %v976, %v992
  %vm995 = vcmp.gt.s32.totalorder %v174, 7
  %v996 = vsel %vm995, %v994, %v893
  %998 = vrot.lane.b32.xlu0 %v996, 32
  %v999 = vpop.permute.xlu0 %998
  %1001 = vst.msk [vmem:[%s5] sm:$0xff] %vm175, %v999
  // Predicated region
  $region22: #{lstm_encoder_forward.1} parent=0 // pred_check
    _
  $region23: #{lstm_encoder_forward.1} parent=0 // pred_check_branch
    %1003 = sbr.rel (0) target = $region25
  $region24: #{lstm_encoder_forward.1} parent=0 // pred_region
    _
  $region25: #{lstm_encoder_forward.1} parent=0 // pred_fallthru
    _
  // Predicated region
  $region26: #{lstm_encoder_forward.1} parent=0 // pred_check
    _
  $region27: #{lstm_encoder_forward.1} parent=0 // pred_check_branch
    %1005 = sbr.rel (0) target = $region29
  $region28: #{lstm_encoder_forward.1} parent=0 // pred_region
    _
  $region29: #{lstm_encoder_forward.1} parent=0 // pred_fallthru
    _

</llo_original>
